<compile_context>
chip_gen: v6e
topology: v6e:2x2x1
jax: 0.10.0
libtpu: 0.0.40
codegen_flags: <defaults>
</compile_context>

<pallas_src>
import functools

import jax
import jax.numpy as jnp
from jax.experimental import pallas as pl
from jax.experimental.pallas import tpu as pltpu

HIDDEN = 768        # nn.Linear(768, 3)
NUM_CLASSES = 3
PADDED_CLASSES = 128  # lane-dense output width


def bert_spc_head_kernel(mask_idx_ref, x_hbm_ref, w_ref, b_ref, out_ref,
                         xs_ref, sems, *, num_valid):
    """Single grid step.

    mask_idx_ref : SMEM (B,)  int32   scalar prefetch
    x_hbm_ref    : HBM  (B, N, D)     backbone last_hidden_state (pl.ANY)
    w_ref        : VMEM (CP, D)       dense weight, PyTorch layout, zero-padded
    b_ref        : VMEM (1, CP)       dense bias, zero-padded
    out_ref      : VMEM (B, CP)       softmax probs (padded lanes = 0)
    xs_ref       : VMEM (B, D)        gathered rows (backbone dtype)
    sems         : DMA semaphores (B,)
    """
    B, _ = xs_ref.shape

    # Put all B row-gather DMAs in flight at once (3 KiB each), then wait.
    copies = []
    for b in range(B):
        copies.append(pltpu.make_async_copy(
            x_hbm_ref.at[b, pl.ds(mask_idx_ref[b], 1), :],
            xs_ref.at[pl.ds(b, 1), :],
            sems.at[b]))
    for cp in copies:
        cp.start()
    for cp in copies:
        cp.wait()

    # nn.Dropout(0.1) is the identity at inference time.
    # TODO(synk): training-mode dropout (stochastic masking) not implemented.

    # dense: (B, D) . (CP, D)^T -> (B, CP), f32 accumulation on the MXU.
    logits = jax.lax.dot_general(
        xs_ref[...], w_ref[...],
        dimension_numbers=(((1,), (1,)), ((), ())),
        preferred_element_type=jnp.float32,
    ) + b_ref[...]

    # Mask padded class lanes so they don't contribute to the softmax sum.
    lane = jax.lax.broadcasted_iota(jnp.int32, logits.shape, 1)
    logits = jnp.where(lane < num_valid, logits, -jnp.inf)

    # softmax(dim=-1), numerically stable, f32 throughout.
    m = jnp.max(logits, axis=-1, keepdims=True)
    e = jnp.exp(logits - m)
    probs = e / jnp.sum(e, axis=-1, keepdims=True)
    out_ref[...] = probs.astype(out_ref.dtype)


def bert_spc_head(bert_out, mask_idx, weight, bias):
    """bert_out: (B, N, D); mask_idx: (B,) int; weight: (C, D) [PyTorch
    nn.Linear layout]; bias: (C,).  Returns softmax probs (B, C)."""
    B, N, D = bert_out.shape
    C = weight.shape[0]
    CP = PADDED_CLASSES

    # Bounds-safety: clamp indices (DMA would fault on true OOB).
    idx = jnp.clip(mask_idx.astype(jnp.int32), 0, N - 1)

    # Lane-dense, zero-padded weight/bias (padded lanes masked in-kernel).
    w_pad = jnp.zeros((CP, D), jnp.float32).at[:C, :].set(
        weight.astype(jnp.float32))
    b_pad = jnp.zeros((1, CP), jnp.float32).at[0, :C].set(
        bias.astype(jnp.float32))

    itemsize = jnp.dtype(bert_out.dtype).itemsize
    cost = pl.CostEstimate(
        flops=2 * B * D * CP,
        transcendentals=B * CP,
        bytes_accessed=B * D * itemsize + CP * D * 4 + B * CP * 4,
    )

    kernel = functools.partial(bert_spc_head_kernel, num_valid=C)

    out_padded = pl.pallas_call(
        kernel,
        out_shape=jax.ShapeDtypeStruct((B, CP), jnp.float32),
        grid_spec=pltpu.PrefetchScalarGridSpec(
            num_scalar_prefetch=1,               # mask_idx lives in SMEM
            grid=(1,),                           # single step: no per-row grid overhead
            in_specs=[
                pl.BlockSpec(memory_space=pl.ANY),           # bert_out stays in HBM
                pl.BlockSpec((CP, D), lambda i, midx: (0, 0)),
                pl.BlockSpec((1, CP), lambda i, midx: (0, 0)),
            ],
            out_specs=pl.BlockSpec((B, CP), lambda i, midx: (0, 0)),
            scratch_shapes=[
                pltpu.VMEM((B, D), bert_out.dtype),          # gathered rows
                pltpu.SemaphoreType.DMA((B,)),                # one sem per row DMA
            ],
        ),
        compiler_params=pltpu.CompilerParams(
            dimension_semantics=("arbitrary",)),
        cost_estimate=cost,
    )(idx, bert_out, w_pad, b_pad)

    return out_padded[:, :C]


if __name__ == "__main__":
    key = jax.random.PRNGKey(0)
    B, N, D, C = 4, 8, HIDDEN, NUM_CLASSES

    k_x, k_idx, k_w, k_b = jax.random.split(key, 4)

    # Synthetic "bert_out" (last_hidden_state of the backbone).
    # TODO(synk): the BERT/GPT2 backbone itself is not implemented in Pallas.
    bert_out = jax.random.normal(k_x, (B, N, D), dtype=jnp.float32)
    mask_idx = jax.random.randint(k_idx, (B,), 0, N, dtype=jnp.int32)

    # PyTorch nn.Linear(768, 3): weight (3, 768), bias (3,).
    weight = jax.random.normal(k_w, (C, D), dtype=jnp.float32) * 0.02
    bias = jax.random.normal(k_b, (C,), dtype=jnp.float32) * 0.02

    out = jax.block_until_ready(bert_spc_head(bert_out, mask_idx, weight, bias))

    # Pure-JAX reference of the same head.
    gathered = bert_out[jnp.arange(B), mask_idx]                 # (B, D)
    ref = jax.nn.softmax(gathered @ weight.T + bias, axis=-1)    # (B, C)

    assert out.shape == (B, C)
    assert jnp.allclose(out, ref, atol=1e-5, rtol=1e-5), "mismatch vs reference"
    assert jnp.allclose(jnp.sum(out, axis=-1), 1.0, atol=1e-5)

    print("KERNEL_OK")
</pallas_src>

<mosaic_0001>
module attributes {stable_mosaic.version = 11 : i64} {
  func.func @bert_spc_head_kernel(%arg0: i32, %arg1: memref<4xi32, #tpu.memory_space<smem>>, %arg2: memref<4x8x768xf32, #tpu.memory_space<any>>, %arg3: memref<128x768xf32, #tpu.memory_space<vmem>>, %arg4: memref<1x128xf32, #tpu.memory_space<vmem>>, %arg5: memref<4x128xf32, #tpu.memory_space<vmem>>, %arg6: memref<4x768xf32, #tpu.memory_space<vmem>>, %arg7: memref<4x!tpu.dma_semaphore, #tpu.memory_space<semaphore_mem>>) attributes {dimension_semantics = [#tpu.dimension_semantics<arbitrary>], iteration_bounds = array<i64: 1>, scalar_prefetch = 1 : i64, scratch_operands = 2 : i64, tpu.core_type = #tpu.core_type<tc>, window_params = [{}, {pipeline_mode = #tpu.pipeline_mode<synchronous>, transform_indices = @transform_1, window_bounds = array<i64: 128, 768>}, {pipeline_mode = #tpu.pipeline_mode<synchronous>, transform_indices = @transform_2, window_bounds = array<i64: 1, 128>}, {pipeline_mode = #tpu.pipeline_mode<synchronous>, transform_indices = @transform_3, window_bounds = array<i64: 4, 128>}]} {
    %c0 = arith.constant 0 : index
    %0 = memref.load %arg1[%c0] : memref<4xi32, #tpu.memory_space<smem>>
    %c1 = arith.constant 1 : index
    %1 = memref.load %arg1[%c1] : memref<4xi32, #tpu.memory_space<smem>>
    %c2 = arith.constant 2 : index
    %2 = memref.load %arg1[%c2] : memref<4xi32, #tpu.memory_space<smem>>
    %c3 = arith.constant 3 : index
    %3 = memref.load %arg1[%c3] : memref<4xi32, #tpu.memory_space<smem>>
    %c0_i32 = arith.constant 0 : i32
    %c0_i32_0 = arith.constant 0 : i32
    %c0_i32_1 = arith.constant 0 : i32
    %4 = tpu.memref_slice %arg2[%c0_i32, %0, %c0_i32_1] : memref<4x8x768xf32, #tpu.memory_space<any>> -> memref<1x1x768xf32, #tpu.memory_space<any>>
    %5 = tpu.memref_squeeze %4 : memref<1x1x768xf32, #tpu.memory_space<any>> -> memref<1x768xf32, #tpu.memory_space<any>>
    %c0_i32_2 = arith.constant 0 : i32
    %c0_i32_3 = arith.constant 0 : i32
    %6 = tpu.memref_slice %arg6[%c0_i32_2, %c0_i32_3] : memref<4x768xf32, #tpu.memory_space<vmem>> -> memref<1x768xf32, #tpu.memory_space<vmem>>
    %7 = tpu.memref_slice %arg7[%c0_i32_0] : memref<4x!tpu.dma_semaphore, #tpu.memory_space<semaphore_mem>> -> memref<1x!tpu.dma_semaphore, #tpu.memory_space<semaphore_mem>>
    %8 = tpu.memref_squeeze %7 : memref<1x!tpu.dma_semaphore, #tpu.memory_space<semaphore_mem>> -> memref<!tpu.dma_semaphore, #tpu.memory_space<semaphore_mem>>
    tpu.enqueue_dma source(%5 : memref<1x768xf32, #tpu.memory_space<any>>) target(%6 : memref<1x768xf32, #tpu.memory_space<vmem>>) target_semaphore(%8 : memref<!tpu.dma_semaphore, #tpu.memory_space<semaphore_mem>>)
    %c1_i32 = arith.constant 1 : i32
    %c1_i32_4 = arith.constant 1 : i32
    %c0_i32_5 = arith.constant 0 : i32
    %9 = tpu.memref_slice %arg2[%c1_i32, %1, %c0_i32_5] : memref<4x8x768xf32, #tpu.memory_space<any>> -> memref<1x1x768xf32, #tpu.memory_space<any>>
    %10 = tpu.memref_squeeze %9 : memref<1x1x768xf32, #tpu.memory_space<any>> -> memref<1x768xf32, #tpu.memory_space<any>>
    %c1_i32_6 = arith.constant 1 : i32
    %c0_i32_7 = arith.constant 0 : i32
    %11 = tpu.memref_slice %arg6[%c1_i32_6, %c0_i32_7] : memref<4x768xf32, #tpu.memory_space<vmem>> -> memref<1x768xf32, #tpu.memory_space<vmem>>
    %12 = tpu.memref_slice %arg7[%c1_i32_4] : memref<4x!tpu.dma_semaphore, #tpu.memory_space<semaphore_mem>> -> memref<1x!tpu.dma_semaphore, #tpu.memory_space<semaphore_mem>>
    %13 = tpu.memref_squeeze %12 : memref<1x!tpu.dma_semaphore, #tpu.memory_space<semaphore_mem>> -> memref<!tpu.dma_semaphore, #tpu.memory_space<semaphore_mem>>
    tpu.enqueue_dma source(%10 : memref<1x768xf32, #tpu.memory_space<any>>) target(%11 : memref<1x768xf32, #tpu.memory_space<vmem>>) target_semaphore(%13 : memref<!tpu.dma_semaphore, #tpu.memory_space<semaphore_mem>>)
    %c2_i32 = arith.constant 2 : i32
    %c2_i32_8 = arith.constant 2 : i32
    %c0_i32_9 = arith.constant 0 : i32
    %14 = tpu.memref_slice %arg2[%c2_i32, %2, %c0_i32_9] : memref<4x8x768xf32, #tpu.memory_space<any>> -> memref<1x1x768xf32, #tpu.memory_space<any>>
    %15 = tpu.memref_squeeze %14 : memref<1x1x768xf32, #tpu.memory_space<any>> -> memref<1x768xf32, #tpu.memory_space<any>>
    %c2_i32_10 = arith.constant 2 : i32
    %c0_i32_11 = arith.constant 0 : i32
    %16 = tpu.memref_slice %arg6[%c2_i32_10, %c0_i32_11] : memref<4x768xf32, #tpu.memory_space<vmem>> -> memref<1x768xf32, #tpu.memory_space<vmem>>
    %17 = tpu.memref_slice %arg7[%c2_i32_8] : memref<4x!tpu.dma_semaphore, #tpu.memory_space<semaphore_mem>> -> memref<1x!tpu.dma_semaphore, #tpu.memory_space<semaphore_mem>>
    %18 = tpu.memref_squeeze %17 : memref<1x!tpu.dma_semaphore, #tpu.memory_space<semaphore_mem>> -> memref<!tpu.dma_semaphore, #tpu.memory_space<semaphore_mem>>
    tpu.enqueue_dma source(%15 : memref<1x768xf32, #tpu.memory_space<any>>) target(%16 : memref<1x768xf32, #tpu.memory_space<vmem>>) target_semaphore(%18 : memref<!tpu.dma_semaphore, #tpu.memory_space<semaphore_mem>>)
    %c3_i32 = arith.constant 3 : i32
    %c3_i32_12 = arith.constant 3 : i32
    %c0_i32_13 = arith.constant 0 : i32
    %19 = tpu.memref_slice %arg2[%c3_i32, %3, %c0_i32_13] : memref<4x8x768xf32, #tpu.memory_space<any>> -> memref<1x1x768xf32, #tpu.memory_space<any>>
    %20 = tpu.memref_squeeze %19 : memref<1x1x768xf32, #tpu.memory_space<any>> -> memref<1x768xf32, #tpu.memory_space<any>>
    %c3_i32_14 = arith.constant 3 : i32
    %c0_i32_15 = arith.constant 0 : i32
    %21 = tpu.memref_slice %arg6[%c3_i32_14, %c0_i32_15] : memref<4x768xf32, #tpu.memory_space<vmem>> -> memref<1x768xf32, #tpu.memory_space<vmem>>
    %22 = tpu.memref_slice %arg7[%c3_i32_12] : memref<4x!tpu.dma_semaphore, #tpu.memory_space<semaphore_mem>> -> memref<1x!tpu.dma_semaphore, #tpu.memory_space<semaphore_mem>>
    %23 = tpu.memref_squeeze %22 : memref<1x!tpu.dma_semaphore, #tpu.memory_space<semaphore_mem>> -> memref<!tpu.dma_semaphore, #tpu.memory_space<semaphore_mem>>
    tpu.enqueue_dma source(%20 : memref<1x768xf32, #tpu.memory_space<any>>) target(%21 : memref<1x768xf32, #tpu.memory_space<vmem>>) target_semaphore(%23 : memref<!tpu.dma_semaphore, #tpu.memory_space<semaphore_mem>>)
    %c0_i32_16 = arith.constant 0 : i32
    %c0_i32_17 = arith.constant 0 : i32
    %c0_i32_18 = arith.constant 0 : i32
    %24 = tpu.memref_slice %arg2[%c0_i32_16, %0, %c0_i32_18] : memref<4x8x768xf32, #tpu.memory_space<any>> -> memref<1x1x768xf32, #tpu.memory_space<any>>
    %25 = tpu.memref_squeeze %24 : memref<1x1x768xf32, #tpu.memory_space<any>> -> memref<1x768xf32, #tpu.memory_space<any>>
    %c0_i32_19 = arith.constant 0 : i32
    %c0_i32_20 = arith.constant 0 : i32
    %26 = tpu.memref_slice %arg6[%c0_i32_19, %c0_i32_20] : memref<4x768xf32, #tpu.memory_space<vmem>> -> memref<1x768xf32, #tpu.memory_space<vmem>>
    %27 = tpu.memref_slice %arg7[%c0_i32_17] : memref<4x!tpu.dma_semaphore, #tpu.memory_space<semaphore_mem>> -> memref<1x!tpu.dma_semaphore, #tpu.memory_space<semaphore_mem>>
    %28 = tpu.memref_squeeze %27 : memref<1x!tpu.dma_semaphore, #tpu.memory_space<semaphore_mem>> -> memref<!tpu.dma_semaphore, #tpu.memory_space<semaphore_mem>>
    tpu.wait_dma2 semaphore(%28 : memref<!tpu.dma_semaphore, #tpu.memory_space<semaphore_mem>>) src(%25 : memref<1x768xf32, #tpu.memory_space<any>>) dst(%26 : memref<1x768xf32, #tpu.memory_space<vmem>>)
    %c1_i32_21 = arith.constant 1 : i32
    %c1_i32_22 = arith.constant 1 : i32
    %c0_i32_23 = arith.constant 0 : i32
    %29 = tpu.memref_slice %arg2[%c1_i32_21, %1, %c0_i32_23] : memref<4x8x768xf32, #tpu.memory_space<any>> -> memref<1x1x768xf32, #tpu.memory_space<any>>
    %30 = tpu.memref_squeeze %29 : memref<1x1x768xf32, #tpu.memory_space<any>> -> memref<1x768xf32, #tpu.memory_space<any>>
    %c1_i32_24 = arith.constant 1 : i32
    %c0_i32_25 = arith.constant 0 : i32
    %31 = tpu.memref_slice %arg6[%c1_i32_24, %c0_i32_25] : memref<4x768xf32, #tpu.memory_space<vmem>> -> memref<1x768xf32, #tpu.memory_space<vmem>>
    %32 = tpu.memref_slice %arg7[%c1_i32_22] : memref<4x!tpu.dma_semaphore, #tpu.memory_space<semaphore_mem>> -> memref<1x!tpu.dma_semaphore, #tpu.memory_space<semaphore_mem>>
    %33 = tpu.memref_squeeze %32 : memref<1x!tpu.dma_semaphore, #tpu.memory_space<semaphore_mem>> -> memref<!tpu.dma_semaphore, #tpu.memory_space<semaphore_mem>>
    tpu.wait_dma2 semaphore(%33 : memref<!tpu.dma_semaphore, #tpu.memory_space<semaphore_mem>>) src(%30 : memref<1x768xf32, #tpu.memory_space<any>>) dst(%31 : memref<1x768xf32, #tpu.memory_space<vmem>>)
    %c2_i32_26 = arith.constant 2 : i32
    %c2_i32_27 = arith.constant 2 : i32
    %c0_i32_28 = arith.constant 0 : i32
    %34 = tpu.memref_slice %arg2[%c2_i32_26, %2, %c0_i32_28] : memref<4x8x768xf32, #tpu.memory_space<any>> -> memref<1x1x768xf32, #tpu.memory_space<any>>
    %35 = tpu.memref_squeeze %34 : memref<1x1x768xf32, #tpu.memory_space<any>> -> memref<1x768xf32, #tpu.memory_space<any>>
    %c2_i32_29 = arith.constant 2 : i32
    %c0_i32_30 = arith.constant 0 : i32
    %36 = tpu.memref_slice %arg6[%c2_i32_29, %c0_i32_30] : memref<4x768xf32, #tpu.memory_space<vmem>> -> memref<1x768xf32, #tpu.memory_space<vmem>>
    %37 = tpu.memref_slice %arg7[%c2_i32_27] : memref<4x!tpu.dma_semaphore, #tpu.memory_space<semaphore_mem>> -> memref<1x!tpu.dma_semaphore, #tpu.memory_space<semaphore_mem>>
    %38 = tpu.memref_squeeze %37 : memref<1x!tpu.dma_semaphore, #tpu.memory_space<semaphore_mem>> -> memref<!tpu.dma_semaphore, #tpu.memory_space<semaphore_mem>>
    tpu.wait_dma2 semaphore(%38 : memref<!tpu.dma_semaphore, #tpu.memory_space<semaphore_mem>>) src(%35 : memref<1x768xf32, #tpu.memory_space<any>>) dst(%36 : memref<1x768xf32, #tpu.memory_space<vmem>>)
    %c3_i32_31 = arith.constant 3 : i32
    %c3_i32_32 = arith.constant 3 : i32
    %c0_i32_33 = arith.constant 0 : i32
    %39 = tpu.memref_slice %arg2[%c3_i32_31, %3, %c0_i32_33] : memref<4x8x768xf32, #tpu.memory_space<any>> -> memref<1x1x768xf32, #tpu.memory_space<any>>
    %40 = tpu.memref_squeeze %39 : memref<1x1x768xf32, #tpu.memory_space<any>> -> memref<1x768xf32, #tpu.memory_space<any>>
    %c3_i32_34 = arith.constant 3 : i32
    %c0_i32_35 = arith.constant 0 : i32
    %41 = tpu.memref_slice %arg6[%c3_i32_34, %c0_i32_35] : memref<4x768xf32, #tpu.memory_space<vmem>> -> memref<1x768xf32, #tpu.memory_space<vmem>>
    %42 = tpu.memref_slice %arg7[%c3_i32_32] : memref<4x!tpu.dma_semaphore, #tpu.memory_space<semaphore_mem>> -> memref<1x!tpu.dma_semaphore, #tpu.memory_space<semaphore_mem>>
    %43 = tpu.memref_squeeze %42 : memref<1x!tpu.dma_semaphore, #tpu.memory_space<semaphore_mem>> -> memref<!tpu.dma_semaphore, #tpu.memory_space<semaphore_mem>>
    tpu.wait_dma2 semaphore(%43 : memref<!tpu.dma_semaphore, #tpu.memory_space<semaphore_mem>>) src(%40 : memref<1x768xf32, #tpu.memory_space<any>>) dst(%41 : memref<1x768xf32, #tpu.memory_space<vmem>>)
    %c0_36 = arith.constant 0 : index
    %c0_37 = arith.constant 0 : index
    %44 = vector.load %arg6[%c0_36, %c0_37] : memref<4x768xf32, #tpu.memory_space<vmem>>, vector<4x768xf32>
    %c0_38 = arith.constant 0 : index
    %c0_39 = arith.constant 0 : index
    %45 = vector.load %arg3[%c0_38, %c0_39] : memref<128x768xf32, #tpu.memory_space<vmem>>, vector<128x768xf32>
    %cst = arith.constant dense<0.000000e+00> : vector<4x128xf32>
    %46 = tpu.matmul %44, %45, %cst {dimension_numbers = #tpu.dot_dimension_numbers<[1], [1], [0], [0], [0, 0, 1, 0], [], []>} : vector<4x768xf32>, vector<128x768xf32>, vector<4x128xf32> -> vector<4x128xf32>
    %c0_40 = arith.constant 0 : index
    %c0_41 = arith.constant 0 : index
    %47 = vector.load %arg4[%c0_40, %c0_41] : memref<1x128xf32, #tpu.memory_space<vmem>>, vector<1x128xf32>
    %48 = vector.broadcast %47 : vector<1x128xf32> to vector<4x128xf32>
    %49 = arith.addf %46, %48 : vector<4x128xf32>
    %50 = tpu.iota {dimensions = array<i32: 1>} : vector<4x128xi32>
    %c3_i32_42 = arith.constant 3 : i32
    %51 = vector.broadcast %c3_i32_42 : i32 to vector<4x128xi32>
    %52 = arith.cmpi slt, %50, %51 : vector<4x128xi32>
    %cst_43 = arith.constant 0xFF800000 : f32
    %53 = vector.broadcast %cst_43 : f32 to vector<4x128xf32>
    %54 = arith.select %52, %49, %53 : vector<4x128xi1>, vector<4x128xf32>
    %cst_44 = arith.constant dense<0xFF800000> : vector<4xf32>
    %55 = vector.multi_reduction <maximumf>, %54, %cst_44 [1] : vector<4x128xf32> to vector<4xf32>
    %56 = vector.shape_cast %55 : vector<4xf32> to vector<4x1xf32>
    %57 = vector.broadcast %56 : vector<4x1xf32> to vector<4x128xf32>
    %58 = arith.subf %54, %57 : vector<4x128xf32>
    %59 = math.exp %58 : vector<4x128xf32>
    %cst_45 = arith.constant dense<0.000000e+00> : vector<4xf32>
    %60 = vector.multi_reduction <add>, %59, %cst_45 [1] : vector<4x128xf32> to vector<4xf32>
    %61 = vector.shape_cast %60 : vector<4xf32> to vector<4x1xf32>
    %62 = vector.broadcast %61 : vector<4x1xf32> to vector<4x128xf32>
    %63 = arith.divf %59, %62 : vector<4x128xf32>
    %c0_46 = arith.constant 0 : index
    %c0_47 = arith.constant 0 : index
    %64 = vector.load %arg5[%c0_46, %c0_47] : memref<4x128xf32, #tpu.memory_space<vmem>>, vector<4x128xf32>
    tpu.vector_store %arg5[%c0_46, %c0_47], %63 {strides = array<i32>} : memref<4x128xf32, #tpu.memory_space<vmem>>, vector<4x128xf32>,
    return
  }
  func.func @transform_1(%arg0: i32, %arg1: memref<4xi32, #tpu.memory_space<smem>>) -> (i32, i32) {
    %c0_i32 = arith.constant 0 : i32
    %c0_i32_0 = arith.constant 0 : i32
    %c0_i32_1 = arith.constant 0 : i32
    return %c0_i32, %c0_i32_0 : i32, i32
  }
  func.func @transform_2(%arg0: i32, %arg1: memref<4xi32, #tpu.memory_space<smem>>) -> (i32, i32) {
    %c0_i32 = arith.constant 0 : i32
    %c0_i32_0 = arith.constant 0 : i32
    %c0_i32_1 = arith.constant 0 : i32
    return %c0_i32, %c0_i32_0 : i32, i32
  }
  func.func @transform_3(%arg0: i32, %arg1: memref<4xi32, #tpu.memory_space<smem>>) -> (i32, i32) {
    %c0_i32 = arith.constant 0 : i32
    %c0_i32_0 = arith.constant 0 : i32
    %c0_i32_1 = arith.constant 0 : i32
    return %c0_i32, %c0_i32_0 : i32, i32
  }
}

</mosaic_0001>

<llo_original>
// kernel: tpu_custom_call.1
$region0: #{tpu_custom_call.1}
  #allocation0 [shape = 'u32[]', space=smem, size = 0x4, offset = 0x4, fixed_abs, tag = 'smem constant byte address 0x4 - core index']
  #allocation1 [shape = 'u32[144,128]{1,0:T(1,128)}', space=vmem, size = 0x12000, scoped, tag = 'internal scratch']
  #allocation2 [shape = 'f32[4,768]{1,0:T(4,128)}', space=vmem, size = 0x3000, scoped, tag = 'scratch operand']
  #allocation3 [shape = 's32[4]{0}', space=sflag, size = 0x10, scoped, tag = 'scratch operand']
  #allocation4 [shape = 's32[1]{0}', space=sflag, size = 0x4, scoped, tag = 'scoped memory for tpu_custom_call.1']
  #allocation5 [shape = 'u8[512]{0}', space=smem, size = 0x200, scoped, tag = 'prefetched SMEM operand 0']
  #allocation10 [shape = 's32[]', space=sflag, size = 0x4, offset = 0, fixed_abs, tag = 'sflag constant byte address 0x0 - dummy sync flag']
  #allocation11 [shape = 's32[]', space=sflag, size = 0x4, offset = 0, fixed_abs, tag = 'sflag constant byte address 0x0 - dummy sync flag']
  #allocation12 [shape = 's32[]', space=sflag, size = 0x4, offset = 0, fixed_abs, tag = 'sflag constant byte address 0x0 - dummy sync flag']
  #allocation13 [shape = 's32[]', space=sflag, size = 0x4, offset = 0, fixed_abs, tag = 'sflag constant byte address 0x0 - dummy sync flag']
  %s0 = inlined_call_operand.hbm [shape: s32[4], index: 0, kind: input, shape index: {}]
  %s1 = inlined_call_operand.hbm [shape: f32[4,8,768], index: 1, kind: input, shape index: {}]
  %s2 = inlined_call_operand.hbm [shape: f32[128,768], index: 2, kind: input, shape index: {}]
  %s3 = inlined_call_operand.vmem [shape: f32[1,128], index: 3, kind: input, shape index: {}]
  %s4 = inlined_call_operand.hbm [shape: f32[4,128], index: 4, kind: output, shape index: {}]
  %s5 = sld [smem:[#allocation0]]
  $region22: #{tpu_custom_call.1} parent=0
    _
  %s7 = ssub.s32 1, %s5
  %s8 = scalar_select 0, %s7, %s5
  %10 = dma.hbm_to_smem %s0, 16, [#allocation5], [#allocation4]
  %11 = dma.done [#allocation4], 16
  %12 = sfence
  $region1: #{tpu_custom_call.1} parent=0
    #allocation6 [shape = 'u8[393216]{0}', space=vmem, size = 0x60000, scoped, tag = 'input window, operand 2, single buffered']
    #allocation7 [shape = 's32[1]{0}', space=sflag, size = 0x4, scoped, tag = 'scoped memory for tpu_custom_call.1']
    #allocation8 [shape = 's32[1]{0}', space=sflag, size = 0x4, scoped, tag = 'scoped memory for tpu_custom_call.1']
    #allocation9 [shape = 'u8[2048]{0}', space=vmem, size = 0x800, scoped, tag = 'output window, operand 0, single buffered']
    %13 = vsyncpa [#allocation7], 0
    %14 = vsyncpa [#allocation8], 0
    // Predicated region
    $region2: #{tpu_custom_call.1} parent=1 // pred_check
      _
    $region3: #{tpu_custom_call.1} parent=1 // pred_check_branch
      %16 = sbr.rel (0) target = $region5
    $region4: #{tpu_custom_call.1} parent=1 // pred_region
      %s18 = ssub.s32 12288, 12288
      %19 = vsyncadd [#allocation7], %s18
      %s20 = sshll.u32 [#allocation6], 4
      %s21 = int_to_ptr.vmem [resolvable:$true] %s20
      %26 = dma.hbm_to_vmem [thread:$0]  %s2, 12288, %s21, [#allocation7], 768, 768, 48
    $region5: #{tpu_custom_call.1} parent=1 // pred_fallthru
      _
    // Predicated region
    $region6: #{tpu_custom_call.1} parent=1 // pred_check
      _
    $region7: #{tpu_custom_call.1} parent=1 // pred_check_branch
      %28 = sbr.rel (0) target = $region9
    $region8: #{tpu_custom_call.1} parent=1 // pred_region
      _
    $region9: #{tpu_custom_call.1} parent=1 // pred_fallthru
      _
    // Predicated region
    $region10: #{tpu_custom_call.1} parent=1 // pred_check
      _
    $region11: #{tpu_custom_call.1} parent=1 // pred_check_branch
      %30 = sbr.rel (0) target = $region13
    $region12: #{tpu_custom_call.1} parent=1 // pred_region
      %31 = dma.done [#allocation7], 12288
    $region13: #{tpu_custom_call.1} parent=1 // pred_fallthru
      _
    %s32 = sld [smem:[#allocation5]]
    %s33 = sld [smem:[#allocation5 + $0x1]]
    %s34 = sld [smem:[#allocation5 + $0x2]]
    %s35 = sld [smem:[#allocation5 + $0x3]]
    %s36 = sshrl.u32 %s32, 3
    %s37 = sand.u32 %s32, 7
    %s38 = smul.u32 %s36, 48
    %s39 = sadd.s32 %s37, %s38
    %s40 = smul.addr %s39, 16
    %s41 = scalar_lea.hbm %s1, %s40
    %s43 = sshll.u32 [#allocation2], 4
    %s44 = int_to_ptr.vmem [resolvable:$true] %s43
    %46 = dma.hbm_to_vmem [thread:$0]  %s41, 96, %s44, [#allocation3], 128, 64, 1
    %s47 = sshrl.u32 %s33, 3
    %s48 = sand.u32 %s33, 7
    %s49 = smul.u32 %s47, 48
    %s50 = sadd.s32 %s48, %s49
    %s51 = sadd.s32 %s50, 48
    %s52 = smul.addr %s51, 16
    %s53 = scalar_lea.hbm %s1, %s52
    %s54 = scalar_lea.vmem [#allocation2], 1
    %s55 = scalar_lea.sflag [#allocation3], 1
    %s57 = sshll.u32 %s54, 4
    %s58 = int_to_ptr.vmem [resolvable:$true] %s57
    %60 = dma.hbm_to_vmem [thread:$0]  %s53, 96, %s58, %s55, 128, 64, 1
    %s61 = sshrl.u32 %s34, 3
    %s62 = sand.u32 %s34, 7
    %s63 = smul.u32 %s61, 48
    %s64 = sadd.s32 %s62, %s63
    %s65 = sadd.s32 %s64, 96
    %s66 = smul.addr %s65, 16
    %s67 = scalar_lea.hbm %s1, %s66
    %s68 = scalar_lea.vmem [#allocation2], 2
    %s69 = scalar_lea.sflag [#allocation3], 2
    %s71 = sshll.u32 %s68, 4
    %s72 = int_to_ptr.vmem [resolvable:$true] %s71
    %74 = dma.hbm_to_vmem [thread:$0]  %s67, 96, %s72, %s69, 128, 64, 1
    %s75 = sshrl.u32 %s35, 3
    %s76 = sand.u32 %s35, 7
    %s77 = smul.u32 %s75, 48
    %s78 = sadd.s32 %s76, %s77
    %s79 = sadd.s32 %s78, 144
    %s80 = smul.addr %s79, 16
    %s81 = scalar_lea.hbm %s1, %s80
    %s82 = scalar_lea.vmem [#allocation2], 3
    %s83 = scalar_lea.sflag [#allocation3], 3
    %s85 = sshll.u32 %s82, 4
    %s86 = int_to_ptr.vmem [resolvable:$true] %s85
    %88 = dma.hbm_to_vmem [thread:$0]  %s81, 96, %s86, %s83, 128, 64, 1
    %s89 = smul.u32 1, 6
    %s90 = sshll.u32 %s89, 4
    %91 = dma.done [#allocation3], %s90
    %s92 = sshll.u32 %s89, 4
    %93 = dma.done %s55, %s92
    %s94 = sshll.u32 %s89, 4
    %95 = dma.done %s69, %s94
    %s96 = sshll.u32 %s89, 4
    %97 = dma.done %s83, %s96
    %v98 = vld [vmem:[#allocation2] sm:$0xff]
    %v99 = vld [vmem:[#allocation2 + $0x8] sm:$0xff]
    %v100 = vld [vmem:[#allocation2 + $0x10] sm:$0xff]
    %v101 = vld [vmem:[#allocation6] sm:$0xff]
    %v102 = vld [vmem:[#allocation6 + $0x8] sm:$0xff]
    %v103 = vld [vmem:[#allocation6 + $0x10] sm:$0xff]
    %v104 = vld [vmem:[#allocation6 + $0x18] sm:$0xff]
    %v105 = vld [vmem:[#allocation6 + $0x20] sm:$0xff]
    %v106 = vld [vmem:[#allocation6 + $0x28] sm:$0xff]
    %v107 = vld [vmem:[#allocation6 + $0x30] sm:$0xff]
    %v108 = vld [vmem:[#allocation6 + $0x38] sm:$0xff]
    %v109 = vld [vmem:[#allocation6 + $0x40] sm:$0xff]
    %v110 = vld [vmem:[#allocation6 + $0x48] sm:$0xff]
    %v111 = vld [vmem:[#allocation6 + $0x50] sm:$0xff]
    %v112 = vld [vmem:[#allocation6 + $0x58] sm:$0xff]
    %v113 = vld [vmem:[#allocation6 + $0x60] sm:$0xff]
    %v114 = vld [vmem:[#allocation6 + $0x68] sm:$0xff]
    %v115 = vld [vmem:[#allocation6 + $0x70] sm:$0xff]
    %v116 = vld [vmem:[#allocation6 + $0x78] sm:$0xff]
    %v117 = vld [vmem:[#allocation6 + $0x80] sm:$0xff]
    %v118 = vld [vmem:[#allocation6 + $0x88] sm:$0xff]
    %v119 = vld [vmem:[#allocation6 + $0x90] sm:$0xff]
    %v120 = vld [vmem:[#allocation6 + $0x98] sm:$0xff]
    %v121 = vld [vmem:[#allocation6 + $0xa0] sm:$0xff]
    %v122 = vld [vmem:[#allocation6 + $0xa8] sm:$0xff]
    %v123 = vld [vmem:[#allocation6 + $0xb0] sm:$0xff]
    %v124 = vld [vmem:[#allocation6 + $0xb8] sm:$0xff]
    %v125 = vld [vmem:[#allocation6 + $0xc0] sm:$0xff]
    %v126 = vld [vmem:[#allocation6 + $0xc8] sm:$0xff]
    %v127 = vld [vmem:[#allocation6 + $0xd0] sm:$0xff]
    %v128 = vld [vmem:[#allocation6 + $0xd8] sm:$0xff]
    %v129 = vld [vmem:[#allocation6 + $0xe0] sm:$0xff]
    %v130 = vld [vmem:[#allocation6 + $0xe8] sm:$0xff]
    %v131 = vld [vmem:[#allocation6 + $0xf0] sm:$0xff]
    %v132 = vld [vmem:[#allocation6 + $0xf8] sm:$0xff]
    %v133 = vld [vmem:[#allocation6 + $0x100] sm:$0xff]
    %v134 = vld [vmem:[#allocation6 + $0x108] sm:$0xff]
    %v135 = vld [vmem:[#allocation6 + $0x110] sm:$0xff]
    %v136 = vld [vmem:[#allocation6 + $0x118] sm:$0xff]
    %v137 = vld [vmem:[#allocation6 + $0x120] sm:$0xff]
    %v138 = vld [vmem:[#allocation6 + $0x128] sm:$0xff]
    %v139 = vld [vmem:[#allocation6 + $0x130] sm:$0xff]
    %v140 = vld [vmem:[#allocation6 + $0x138] sm:$0xff]
    %v141 = vld [vmem:[#allocation6 + $0x140] sm:$0xff]
    %v142 = vld [vmem:[#allocation6 + $0x148] sm:$0xff]
    %v143 = vld [vmem:[#allocation6 + $0x150] sm:$0xff]
    %v144 = vld [vmem:[#allocation6 + $0x158] sm:$0xff]
    %v145 = vld [vmem:[#allocation6 + $0x160] sm:$0xff]
    %v146 = vld [vmem:[#allocation6 + $0x168] sm:$0xff]
    %v147 = vld [vmem:[#allocation6 + $0x170] sm:$0xff]
    %v148 = vld [vmem:[#allocation6 + $0x178] sm:$0xff]
    %v149 = vld [vmem:[#allocation6 + $0x180] sm:$0xff]
    %v150 = vld [vmem:[#allocation6 + $0x188] sm:$0xff]
    %v151 = vld [vmem:[#allocation6 + $0x190] sm:$0xff]
    %v152 = vld [vmem:[#allocation6 + $0x198] sm:$0xff]
    %v153 = vld [vmem:[#allocation6 + $0x1a0] sm:$0xff]
    %v154 = vld [vmem:[#allocation6 + $0x1a8] sm:$0xff]
    %v155 = vld [vmem:[#allocation6 + $0x1b0] sm:$0xff]
    %v156 = vld [vmem:[#allocation6 + $0x1b8] sm:$0xff]
    %v157 = vld [vmem:[#allocation6 + $0x1c0] sm:$0xff]
    %v158 = vld [vmem:[#allocation6 + $0x1c8] sm:$0xff]
    %v159 = vld [vmem:[#allocation6 + $0x1d0] sm:$0xff]
    %v160 = vld [vmem:[#allocation6 + $0x1d8] sm:$0xff]
    %v161 = vld [vmem:[#allocation6 + $0x1e0] sm:$0xff]
    %v162 = vld [vmem:[#allocation6 + $0x1e8] sm:$0xff]
    %v163 = vld [vmem:[#allocation6 + $0x1f0] sm:$0xff]
    %v164 = vld [vmem:[#allocation6 + $0x1f8] sm:$0xff]
    %v165 = vld [vmem:[#allocation6 + $0x200] sm:$0xff]
    %v166 = vld [vmem:[#allocation6 + $0x208] sm:$0xff]
    %v167 = vld [vmem:[#allocation6 + $0x210] sm:$0xff]
    %v168 = vld [vmem:[#allocation6 + $0x218] sm:$0xff]
    %v169 = vld [vmem:[#allocation6 + $0x220] sm:$0xff]
    %v170 = vld [vmem:[#allocation6 + $0x228] sm:$0xff]
    %v171 = vld [vmem:[#allocation6 + $0x230] sm:$0xff]
    %v172 = vld [vmem:[#allocation6 + $0x238] sm:$0xff]
    %v173 = vld [vmem:[#allocation6 + $0x240] sm:$0xff]
    %v174 = vld [vmem:[#allocation6 + $0x248] sm:$0xff]
    %v175 = vld [vmem:[#allocation6 + $0x250] sm:$0xff]
    %v176 = vld [vmem:[#allocation6 + $0x258] sm:$0xff]
    %v177 = vld [vmem:[#allocation6 + $0x260] sm:$0xff]
    %v178 = vld [vmem:[#allocation6 + $0x268] sm:$0xff]
    %v179 = vld [vmem:[#allocation6 + $0x270] sm:$0xff]
    %v180 = vld [vmem:[#allocation6 + $0x278] sm:$0xff]
    %v181 = vld [vmem:[#allocation6 + $0x280] sm:$0xff]
    %v182 = vld [vmem:[#allocation6 + $0x288] sm:$0xff]
    %v183 = vld [vmem:[#allocation6 + $0x290] sm:$0xff]
    %v184 = vld [vmem:[#allocation6 + $0x298] sm:$0xff]
    %v185 = vld [vmem:[#allocation6 + $0x2a0] sm:$0xff]
    %v186 = vld [vmem:[#allocation6 + $0x2a8] sm:$0xff]
    %v187 = vld [vmem:[#allocation6 + $0x2b0] sm:$0xff]
    %v188 = vld [vmem:[#allocation6 + $0x2b8] sm:$0xff]
    %v189 = vld [vmem:[#allocation6 + $0x2c0] sm:$0xff]
    %v190 = vld [vmem:[#allocation6 + $0x2c8] sm:$0xff]
    %v191 = vld [vmem:[#allocation6 + $0x2d0] sm:$0xff]
    %v192 = vld [vmem:[#allocation6 + $0x2d8] sm:$0xff]
    %v193 = vld [vmem:[#allocation6 + $0x2e0] sm:$0xff]
    %v194 = vld [vmem:[#allocation6 + $0x2e8] sm:$0xff]
    %v195 = vld [vmem:[#allocation6 + $0x2f0] sm:$0xff]
    %v196 = vld [vmem:[#allocation6 + $0x2f8] sm:$0xff]
    %v197 = vld [vmem:[%s3] sm:$0x1]
    %v199 = vlaneseq
    %v200 = vshrl.u32 %v199, 7
    %v201 = vsub.s32 0, %v200
    %v202 = vrot.slane %v197, %v201
    %v207 = vcombine.high %v98, %v98
    %v208 = vcombine.high %v99, %v99
    %v209 = vcombine.high %v100, %v100
    %213 = vmatprep.subr.mxu0 %v192
    %214 = vmatpush1.xpose.msra.mxu0 %v191
    %215 = vmatprep.subr.mxu0 %v186
    %216 = vmatpush1.xpose.msra.mxu0 %v185
    %217 = vmatprep.subr.mxu0 %v180
    %218 = vmatpush1.xpose.msra.mxu0 %v179
    %219 = vmatprep.subr.mxu0 %v174
    %220 = vmatpush1.xpose.msra.mxu0 %v173
    %221 = vmatprep.subr.mxu0 %v168
    %222 = vmatpush1.xpose.msra.mxu0 %v167
    %223 = vmatprep.subr.mxu0 %v162
    %224 = vmatpush1.xpose.msra.mxu0 %v161
    %225 = vmatprep.subr.mxu0 %v156
    %226 = vmatpush1.xpose.msra.mxu0 %v155
    %227 = vmatprep.subr.mxu0 %v150
    %228 = vmatpush1.xpose.msra.mxu0 %v149
    %229 = vmatprep.subr.mxu0 %v144
    %230 = vmatpush1.xpose.msra.mxu0 %v143
    %231 = vmatprep.subr.mxu0 %v138
    %232 = vmatpush1.xpose.msra.mxu0 %v137
    %233 = vmatprep.subr.mxu0 %v132
    %234 = vmatpush1.xpose.msra.mxu0 %v131
    %235 = vmatprep.subr.mxu0 %v126
    %236 = vmatpush1.xpose.msra.mxu0 %v125
    %237 = vmatprep.subr.mxu0 %v120
    %238 = vmatpush1.xpose.msra.mxu0 %v119
    %239 = vmatprep.subr.mxu0 %v114
    %240 = vmatpush1.xpose.msra.mxu0 %v113
    %241 = vmatprep.subr.mxu0 %v108
    %242 = vmatpush1.xpose.msra.mxu0 %v107
    %243 = vmatprep.subr.mxu0 %v102
    %244 = vmatpush1.xpose.msra.mxu0 %v101
    %245 = vmatprep.subr.mxu0 0.0
    %246 = vmatpush2.xpose.msra.mxu0 0.0
    %247 = vmatprep.subr.mxu0 0.0
    %248 = vmatpush2.xpose.msra.mxu0 0.0
    %249 = vmatprep.subr.mxu0 0.0
    %250 = vmatpush2.xpose.msra.mxu0 0.0
    %251 = vmatprep.subr.mxu0 0.0
    %252 = vmatpush2.xpose.msra.mxu0 0.0
    %253 = vmatprep.subr.mxu0 0.0
    %254 = vmatpush2.xpose.msra.mxu0 0.0
    %255 = vmatprep.subr.mxu0 0.0
    %256 = vmatpush2.xpose.msra.mxu0 0.0
    %257 = vmatprep.subr.mxu0 0.0
    %258 = vmatpush2.xpose.msra.mxu0 0.0
    %259 = vmatprep.subr.mxu0 0.0
    %260 = vmatpush2.xpose.msra.mxu0 0.0
    %261 = vmatprep.subr.mxu0 0.0
    %262 = vmatpush2.xpose.msra.mxu0 0.0
    %263 = vmatprep.subr.mxu0 0.0
    %264 = vmatpush2.xpose.msra.mxu0 0.0
    %265 = vmatprep.subr.mxu0 0.0
    %266 = vmatpush2.xpose.msra.mxu0 0.0
    %267 = vmatprep.subr.mxu0 0.0
    %268 = vmatpush2.xpose.msra.mxu0 0.0
    %269 = vmatprep.subr.mxu0 0.0
    %270 = vmatpush2.xpose.msra.mxu0 0.0
    %271 = vmatprep.subr.mxu0 0.0
    %272 = vmatpush2.xpose.msra.mxu0 0.0
    %273 = vmatprep.subr.mxu0 0.0
    %274 = vmatpush2.xpose.msra.mxu0 0.0
    %275 = vmatprep.subr.mxu0 0.0
    %276 = vmatpush2.xpose.msra.mxu0 0.0
    %277 = vmatprep.mubr.f32.mxu0 %v207
    %278 = vmatmul.mubr.f32.gmra.mxu0 %v98
    %v279 = vpop.f32.mrf.mxu0
    %v280 = vadd.f32 %v202, %v279
    %v281 = vpop.f32.mrf.mxu0
    %282 = vdwg.mxu0
    %283 = vmatprep.subr.mxu0 %v194
    %284 = vmatpush1.xpose.msra.mxu0 %v193
    %285 = vmatprep.subr.mxu0 %v188
    %286 = vmatpush1.xpose.msra.mxu0 %v187
    %287 = vmatprep.subr.mxu0 %v182
    %288 = vmatpush1.xpose.msra.mxu0 %v181
    %289 = vmatprep.subr.mxu0 %v176
    %290 = vmatpush1.xpose.msra.mxu0 %v175
    %291 = vmatprep.subr.mxu0 %v170
    %292 = vmatpush1.xpose.msra.mxu0 %v169
    %293 = vmatprep.subr.mxu0 %v164
    %294 = vmatpush1.xpose.msra.mxu0 %v163
    %295 = vmatprep.subr.mxu0 %v158
    %296 = vmatpush1.xpose.msra.mxu0 %v157
    %297 = vmatprep.subr.mxu0 %v152
    %298 = vmatpush1.xpose.msra.mxu0 %v151
    %299 = vmatprep.subr.mxu0 %v146
    %300 = vmatpush1.xpose.msra.mxu0 %v145
    %301 = vmatprep.subr.mxu0 %v140
    %302 = vmatpush1.xpose.msra.mxu0 %v139
    %303 = vmatprep.subr.mxu0 %v134
    %304 = vmatpush1.xpose.msra.mxu0 %v133
    %305 = vmatprep.subr.mxu0 %v128
    %306 = vmatpush1.xpose.msra.mxu0 %v127
    %307 = vmatprep.subr.mxu0 %v122
    %308 = vmatpush1.xpose.msra.mxu0 %v121
    %309 = vmatprep.subr.mxu0 %v116
    %310 = vmatpush1.xpose.msra.mxu0 %v115
    %311 = vmatprep.subr.mxu0 %v110
    %312 = vmatpush1.xpose.msra.mxu0 %v109
    %313 = vmatprep.subr.mxu0 %v104
    %314 = vmatpush1.xpose.msra.mxu0 %v103
    %315 = vmatprep.subr.mxu0 0.0
    %316 = vmatpush2.xpose.msra.mxu0 0.0
    %317 = vmatprep.subr.mxu0 0.0
    %318 = vmatpush2.xpose.msra.mxu0 0.0
    %319 = vmatprep.subr.mxu0 0.0
    %320 = vmatpush2.xpose.msra.mxu0 0.0
    %321 = vmatprep.subr.mxu0 0.0
    %322 = vmatpush2.xpose.msra.mxu0 0.0
    %323 = vmatprep.subr.mxu0 0.0
    %324 = vmatpush2.xpose.msra.mxu0 0.0
    %325 = vmatprep.subr.mxu0 0.0
    %326 = vmatpush2.xpose.msra.mxu0 0.0
    %327 = vmatprep.subr.mxu0 0.0
    %328 = vmatpush2.xpose.msra.mxu0 0.0
    %329 = vmatprep.subr.mxu0 0.0
    %330 = vmatpush2.xpose.msra.mxu0 0.0
    %331 = vmatprep.subr.mxu0 0.0
    %332 = vmatpush2.xpose.msra.mxu0 0.0
    %333 = vmatprep.subr.mxu0 0.0
    %334 = vmatpush2.xpose.msra.mxu0 0.0
    %335 = vmatprep.subr.mxu0 0.0
    %336 = vmatpush2.xpose.msra.mxu0 0.0
    %337 = vmatprep.subr.mxu0 0.0
    %338 = vmatpush2.xpose.msra.mxu0 0.0
    %339 = vmatprep.subr.mxu0 0.0
    %340 = vmatpush2.xpose.msra.mxu0 0.0
    %341 = vmatprep.subr.mxu0 0.0
    %342 = vmatpush2.xpose.msra.mxu0 0.0
    %343 = vmatprep.subr.mxu0 0.0
    %344 = vmatpush2.xpose.msra.mxu0 0.0
    %345 = vmatprep.subr.mxu0 0.0
    %346 = vmatpush2.xpose.msra.mxu0 0.0
    %347 = vmatprep.mubr.f32.mxu0 %v208
    %348 = vmatmul.mubr.f32.gmra.mxu0 %v99
    %v349 = vpop.f32.mrf.mxu0
    %v350 = vadd.f32 %v280, %v349
    %v351 = vpop.f32.mrf.mxu0
    %352 = vdwg.mxu0
    %353 = vmatprep.subr.mxu0 %v196
    %354 = vmatpush1.xpose.msra.mxu0 %v195
    %355 = vmatprep.subr.mxu0 %v190
    %356 = vmatpush1.xpose.msra.mxu0 %v189
    %357 = vmatprep.subr.mxu0 %v184
    %358 = vmatpush1.xpose.msra.mxu0 %v183
    %359 = vmatprep.subr.mxu0 %v178
    %360 = vmatpush1.xpose.msra.mxu0 %v177
    %361 = vmatprep.subr.mxu0 %v172
    %362 = vmatpush1.xpose.msra.mxu0 %v171
    %363 = vmatprep.subr.mxu0 %v166
    %364 = vmatpush1.xpose.msra.mxu0 %v165
    %365 = vmatprep.subr.mxu0 %v160
    %366 = vmatpush1.xpose.msra.mxu0 %v159
    %367 = vmatprep.subr.mxu0 %v154
    %368 = vmatpush1.xpose.msra.mxu0 %v153
    %369 = vmatprep.subr.mxu0 %v148
    %370 = vmatpush1.xpose.msra.mxu0 %v147
    %371 = vmatprep.subr.mxu0 %v142
    %372 = vmatpush1.xpose.msra.mxu0 %v141
    %373 = vmatprep.subr.mxu0 %v136
    %374 = vmatpush1.xpose.msra.mxu0 %v135
    %375 = vmatprep.subr.mxu0 %v130
    %376 = vmatpush1.xpose.msra.mxu0 %v129
    %377 = vmatprep.subr.mxu0 %v124
    %378 = vmatpush1.xpose.msra.mxu0 %v123
    %379 = vmatprep.subr.mxu0 %v118
    %380 = vmatpush1.xpose.msra.mxu0 %v117
    %381 = vmatprep.subr.mxu0 %v112
    %382 = vmatpush1.xpose.msra.mxu0 %v111
    %383 = vmatprep.subr.mxu0 %v106
    %384 = vmatpush1.xpose.msra.mxu0 %v105
    %385 = vmatprep.subr.mxu0 0.0
    %386 = vmatpush2.xpose.msra.mxu0 0.0
    %387 = vmatprep.subr.mxu0 0.0
    %388 = vmatpush2.xpose.msra.mxu0 0.0
    %389 = vmatprep.subr.mxu0 0.0
    %390 = vmatpush2.xpose.msra.mxu0 0.0
    %391 = vmatprep.subr.mxu0 0.0
    %392 = vmatpush2.xpose.msra.mxu0 0.0
    %393 = vmatprep.subr.mxu0 0.0
    %394 = vmatpush2.xpose.msra.mxu0 0.0
    %395 = vmatprep.subr.mxu0 0.0
    %396 = vmatpush2.xpose.msra.mxu0 0.0
    %397 = vmatprep.subr.mxu0 0.0
    %398 = vmatpush2.xpose.msra.mxu0 0.0
    %399 = vmatprep.subr.mxu0 0.0
    %400 = vmatpush2.xpose.msra.mxu0 0.0
    %401 = vmatprep.subr.mxu0 0.0
    %402 = vmatpush2.xpose.msra.mxu0 0.0
    %403 = vmatprep.subr.mxu0 0.0
    %404 = vmatpush2.xpose.msra.mxu0 0.0
    %405 = vmatprep.subr.mxu0 0.0
    %406 = vmatpush2.xpose.msra.mxu0 0.0
    %407 = vmatprep.subr.mxu0 0.0
    %408 = vmatpush2.xpose.msra.mxu0 0.0
    %409 = vmatprep.subr.mxu0 0.0
    %410 = vmatpush2.xpose.msra.mxu0 0.0
    %411 = vmatprep.subr.mxu0 0.0
    %412 = vmatpush2.xpose.msra.mxu0 0.0
    %413 = vmatprep.subr.mxu0 0.0
    %414 = vmatpush2.xpose.msra.mxu0 0.0
    %415 = vmatprep.subr.mxu0 0.0
    %416 = vmatpush2.xpose.msra.mxu0 0.0
    %417 = vmatprep.mubr.f32.mxu0 %v209
    %418 = vmatmul.mubr.f32.gmra.mxu0 %v100
    %v419 = vpop.f32.mrf.mxu0
    %v420 = vadd.f32 %v350, %v419
    %v421 = vpop.f32.mrf.mxu0
    %422 = vdwg.mxu0
    %v423 = vlaneseq
    %v424 = vand.u32 %v423, 127
    %vm425 = vcmp.lt.s32.totalorder %v424, 3
    %v426 = vsel %vm425, %v420, -inf
    %vm427 = vcmask 1043456
    %v428 = vsel %vm427, %v426, -inf
    %429 = vmax.xlane.f32.xlu0 %v428
    %v430 = vpop.xlane.xlu0 %429
    %v431 = vsub.f32 %v426, %v430
    %v432 = vmul.f32 %v431, 1.442695
    %v433 = vpow.pop %v432
    %v434 = vsel %vm427, %v433, 0.0
    %435 = vadd.xlane.f32.xlu0 %v434
    %v436 = vpop.xlane.xlu0 %435
    %v437 = vrcp.pop %v436
    %v438 = vmul.f32 %v433, %v437
    %439 = vst [vmem:[#allocation9] sm:$0xf] %v438
    // Predicated region
    $region14: #{tpu_custom_call.1} parent=1 // pred_check
      _
    $region15: #{tpu_custom_call.1} parent=1 // pred_check_branch
      %441 = sbr.rel (0) target = $region17
    $region16: #{tpu_custom_call.1} parent=1 // pred_region
      %s443 = ssub.s32 64, 64
      %444 = vsyncadd [#allocation8], %s443
      %s446 = sshll.u32 [#allocation9], 4
      %s447 = int_to_ptr.vmem [resolvable:$true] %s446
      %449 = dma.vmem_to_hbm [thread:$0]  %s447, 64, %s4, [#allocation8]
    $region17: #{tpu_custom_call.1} parent=1 // pred_fallthru
      _
    // Predicated region
    $region18: #{tpu_custom_call.1} parent=1 // pred_check
      _
    $region19: #{tpu_custom_call.1} parent=1 // pred_check_branch
      %451 = sbr.rel (0) target = $region21
    $region20: #{tpu_custom_call.1} parent=1 // pred_region
      %452 = dma.done [#allocation8], 64
    $region21: #{tpu_custom_call.1} parent=1 // pred_fallthru
      _
    %453 = vsyncpa [#allocation7], 1
    %454 = vsyncpa [#allocation8], 1
  %455 = vsyncmov [#allocation3]
  %s456 = vpop.sfrf %455
  %p457 = scmp.eq.s32.totalorder %s456, 0
  %p458 = pneg %p457
  %460 = shalt.err (%p458)
  %s461 = scalar_lea.sflag [#allocation3], 1
  %462 = vsyncmov %s461
  %s463 = vpop.sfrf %462
  %p464 = scmp.eq.s32.totalorder %s463, 0
  %p465 = pneg %p464
  %467 = shalt.err (%p465)
  %s468 = scalar_lea.sflag [#allocation3], 2
  %469 = vsyncmov %s468
  %s470 = vpop.sfrf %469
  %p471 = scmp.eq.s32.totalorder %s470, 0
  %p472 = pneg %p471
  %474 = shalt.err (%p472)
  %s475 = scalar_lea.sflag [#allocation3], 3
  %476 = vsyncmov %s475
  %s477 = vpop.sfrf %476
  %p478 = scmp.eq.s32.totalorder %s477, 0
  %p479 = pneg %p478
  %481 = shalt.err (%p479)

</llo_original>
